<compile_context>
chip_gen: v6e
topology: v6e:2x2x1
jax: 0.10.0
libtpu: 0.0.40
codegen_flags: <defaults>
</compile_context>

<pallas_src>
import math
import functools

import jax
import jax.numpy as jnp
import numpy as np
from jax.experimental import pallas as pl
from jax.experimental.pallas import tpu as pltpu


def _layernorm_f32(x, w, b, eps=1e-5):
    # x: (R, C) f32, w/b: (1, C) f32  (biased variance + eps=1e-5 matches PyTorch)
    mu = jnp.mean(x, axis=-1, keepdims=True)
    var = jnp.mean((x - mu) ** 2, axis=-1, keepdims=True)
    return (x - mu) * jax.lax.rsqrt(var + eps) * w + b


def _zigzag(g, n):
    # Permute grid index g in [0, n): even g -> g//2 (cheap early tiles), odd g ->
    # n-1-g//2 (expensive late tiles).  Bijective; balances the causal triangle when
    # the q-tile axis is split across v7x's two TensorCores.
    half = g // 2
    return jnp.where(g % 2 == 0, half, n - 1 - half)


# ----------------------------- Kernel A: ln_1 + QKV (head-major) ----------------------------- #
def ln_qkv_kernel(x_ref, ln1w_ref, ln1b_ref, wattn_ref, battn_ref,
                  q_ref, k_ref, v_ref, *, n_head, scale):
    Tt, C = x_ref.shape
    hd = C // n_head
    x = x_ref[...].astype(jnp.float32)                       # (Tt, C)
    h = _layernorm_f32(x, ln1w_ref[...], ln1b_ref[...])
    qkv = jnp.dot(h.astype(jnp.bfloat16), wattn_ref[...],    # bf16 x bf16 -> f32 acc
                  preferred_element_type=jnp.float32) + battn_ref[...]

    def head_major(m):                                        # (Tt, C) -> (n_head, Tt, hd)
        return jnp.swapaxes(m.reshape(Tt, n_head, hd), 0, 1)  # once per token tile

    q_ref[...] = head_major(qkv[:, :C] * scale).astype(q_ref.dtype)   # fold 1/sqrt(hd) here
    k_ref[...] = head_major(qkv[:, C:2 * C]).astype(k_ref.dtype)
    v_ref[...] = head_major(qkv[:, 2 * C:]).astype(v_ref.dtype)


# ------------------- Kernel B: causal attention + proj + ln_2 + MLP + residuals ------------------- #
def attn_mlp_kernel(x_ref, q_ref, k_ref, v_ref, wproj_ref, bproj_ref,
                    ln2w_ref, ln2b_ref, wfc_ref, bfc_ref, wproj2_ref, bproj2_ref,
                    o_ref, m_sc, l_sc, acc_sc, *, n_head, n_qt):
    Tq, C = x_ref.shape                                       # query tile (batch dim squeezed)
    hd = C // n_head

    g = pl.program_id(1)
    qi = _zigzag(g, n_qt)                                     # actual q-tile index (matches index maps)
    q_start = pl.multiple_of(qi * Tq, Tq)

    q3 = q_ref[...]                                           # (n_head, Tq, hd) bf16, pre-scaled

    def scores(k_start):
        kk = k_ref[:, pl.ds(k_start, Tq), :]                  # (n_head, Tq, hd)
        return jax.lax.dot_general(q3, kk, (((2,), (2,)), ((0,), (0,))),
                                   preferred_element_type=jnp.float32)   # (n_head, Tq, Tk)

    def pv(p, k_start):
        vv = v_ref[:, pl.ds(k_start, Tq), :]
        return jax.lax.dot_general(p.astype(jnp.bfloat16), vv,
                                   (((2,), (1,)), ((0,), (0,))),
                                   preferred_element_type=jnp.float32)   # (n_head, Tq, hd)

    # --- diagonal (masked) KV tile first: initializes m/l/acc directly, no rescale ---
    s = scores(q_start)
    qpos = jax.lax.broadcasted_iota(jnp.int32, (Tq, Tq), 0)   # in-tile relative positions suffice
    kpos = jax.lax.broadcasted_iota(jnp.int32, (Tq, Tq), 1)
    s = jnp.where((kpos <= qpos)[None, :, :], s, -1e30)       # finite mask -> NaN-free
    m0 = jnp.max(s, axis=-1, keepdims=True)
    p = jnp.exp(s - m0)
    m_sc[...] = m0
    l_sc[...] = jnp.sum(p, axis=-1, keepdims=True)
    acc_sc[...] = pv(p, q_start)

    # --- strictly-below-diagonal KV tiles: no masking, standard online-softmax update ---
    @pl.loop(0, qi)
    def _(kt):
        k_start = pl.multiple_of(kt * Tq, Tq)
        s = scores(k_start)
        m_prev = m_sc[...]
        m_new = jnp.maximum(m_prev, jnp.max(s, axis=-1, keepdims=True))
        alpha = jnp.exp(m_prev - m_new)
        p = jnp.exp(s - m_new)
        l_sc[...] = alpha * l_sc[...] + jnp.sum(p, axis=-1, keepdims=True)
        acc_sc[...] = alpha * acc_sc[...] + pv(p, k_start)
        m_sc[...] = m_new

    # Normalize (EUP-side approx reciprocal) and relayout heads->lanes ONCE per q tile (bf16).
    y = (acc_sc[...] * pl.reciprocal(l_sc[...], approx=True)).astype(jnp.bfloat16)
    y = jnp.swapaxes(y, 0, 1).reshape(Tq, C)                  # (Tq, C)

    # Output projection as a single K=C matmul (fills the MXU; no per-head sum/intermediate).
    y = jnp.dot(y, wproj_ref[...], preferred_element_type=jnp.float32) + bproj_ref[...]

    x = x_ref[...].astype(jnp.float32) + y                    # residual 1

    # ln_2 + MLP (GELU exact erf form, matching torch.nn.GELU() default).
    h2 = _layernorm_f32(x, ln2w_ref[...], ln2b_ref[...])
    ff = jnp.dot(h2.astype(jnp.bfloat16), wfc_ref[...],
                 preferred_element_type=jnp.float32) + bfc_ref[...]
    ff = 0.5 * ff * (1.0 + jax.lax.erf(ff * (1.0 / math.sqrt(2.0))))
    ff = jnp.dot(ff.astype(jnp.bfloat16), wproj2_ref[...],
                 preferred_element_type=jnp.float32) + bproj2_ref[...]
    o_ref[...] = (x + ff).astype(o_ref.dtype)                 # residual 2


# ----------------------------------------- Wrapper ----------------------------------------- #
def _pick_tile(n, candidates):
    for c in candidates:
        if c <= n and n % c == 0:
            return c
    return n


def _vmem_limit(nbytes):
    # Per-generation scoped-VMEM budget: footprint + headroom, capped at ~7/8 of the
    # chip's physical VMEM (128 MiB on v5e/v6e, 64 MiB per TensorCore on v7x).
    try:
        cap = int(pltpu.get_tpu_info().vmem_capacity_bytes)
    except Exception:
        cap = 64 << 20
    hi = (cap * 7) // 8
    return int(min(max(nbytes + (8 << 20), 32 << 20), hi))


def _const_spec(shape):
    # Constant-index block: revisited every grid step, never re-fetched -> single buffer.
    nd = len(shape)
    return pl.BlockSpec(shape, lambda *_: (0,) * nd, pipeline_mode=pl.Buffered(1))


def block_forward(x, params, n_head):
    (ln1_w, ln1_b, w_attn, b_attn, w_proj, b_proj,
     ln2_w, ln2_b, w_fc, b_fc, w_proj2, b_proj2) = params
    B, T, C = x.shape
    assert C % n_head == 0
    hd = C // n_head
    # TODO(synk): production shapes should pad C (and ideally hd) to a multiple of 128;
    # the demo config (C=32, hd=8) is lane-sparse but functionally correct.

    # bf16 weights HBM-side for all matmuls; LayerNorm params and biases stay f32.
    w_attn_bf = w_attn.astype(jnp.bfloat16)
    w_proj_bf = w_proj.astype(jnp.bfloat16)
    w_fc_bf = w_fc.astype(jnp.bfloat16)
    w_proj2_bf = w_proj2.astype(jnp.bfloat16)

    # ---------------- Kernel A: ln_1 + QKV, emitted head-major & pre-scaled ---------------- #
    Tt = _pick_tile(T, (1024, 512, 256, 128, 64, 32, 16, 8))
    scale = 1.0 / math.sqrt(hd)
    est_a = (2 * Tt * C * 4                       # x tile (f32, double-buffered)
             + C * 3 * C * 2 + 3 * C * 4 + 2 * C * 4   # w_attn (bf16, single-buffered) + biases/ln
             + 2 * 3 * Tt * C * 2                 # q/k/v out tiles (bf16, double-buffered)
             + 3 * Tt * 3 * C * 4)                # f32 intermediates / relayout headroom
    qkv_shape = jax.ShapeDtypeStruct((B, n_head, T, hd), jnp.bfloat16)
    kern_a = functools.partial(ln_qkv_kernel, n_head=n_head, scale=scale)
    q, k, v = pl.pallas_call(
        kern_a,
        out_shape=(qkv_shape, qkv_shape, qkv_shape),
        grid_spec=pltpu.PrefetchScalarGridSpec(
            num_scalar_prefetch=0,
            grid=(B, T // Tt),
            in_specs=[
                pl.BlockSpec((None, Tt, C), lambda b, t: (b, t, 0)),
                _const_spec((1, C)),              # ln1 w
                _const_spec((1, C)),              # ln1 b
                _const_spec((C, 3 * C)),          # w_attn
                _const_spec((1, 3 * C)),          # b_attn
            ],
            out_specs=[
                pl.BlockSpec((None, n_head, Tt, hd), lambda b, t: (b, 0, t, 0)),
                pl.BlockSpec((None, n_head, Tt, hd), lambda b, t: (b, 0, t, 0)),
                pl.BlockSpec((None, n_head, Tt, hd), lambda b, t: (b, 0, t, 0)),
            ],
        ),
        compiler_params=pltpu.CompilerParams(
            dimension_semantics=("parallel", "parallel"),
            vmem_limit_bytes=_vmem_limit(est_a)),
    )(x, ln1_w, ln1_b, w_attn_bf, b_attn)

    # ------- Kernel B: flash attention + proj + ln_2 + MLP, grid (batch, q-tile) ------- #
    Tq = _pick_tile(T, (256, 128, 64, 32, 16, 8))
    n_qt = T // Tq
    # TODO(synk): for very long T on v7x (64 MiB VMEM), stream K/V tiles with a manual
    # double buffer instead of keeping the full (n_head, T, hd) K/V blocks resident.
    est_b = (2 * 2 * Tq * C * 4                   # x in + out (f32, double-buffered)
             + 2 * Tq * C * 2                     # Q tile (bf16, double-buffered)
             + 2 * 2 * T * C * 2                  # resident K and V (bf16, double-buffered)
             + (C * C + 4 * C * C + 4 * C * C) * 2  # single-buffered bf16 weights
             + 16 * C * 4                         # biases / ln params
             + 2 * n_head * Tq * Tq * 4           # score / p blocks
             + n_head * Tq * (hd + 2) * 4         # online-softmax scratch
             + 2 * Tq * C * 4 + 2 * Tq * 4 * C * 4)  # epilogue f32 intermediates
    kern_b = functools.partial(attn_mlp_kernel, n_head=n_head, n_qt=n_qt)
    xmap = lambda b, g: (b, _zigzag(g, n_qt), 0)
    qmap = lambda b, g: (b, 0, _zigzag(g, n_qt), 0)
    kvmap = lambda b, g: (b, 0, 0, 0)
    out = pl.pallas_call(
        kern_b,
        out_shape=jax.ShapeDtypeStruct((B, T, C), x.dtype),
        grid_spec=pltpu.PrefetchScalarGridSpec(
            num_scalar_prefetch=0,
            grid=(B, n_qt),
            in_specs=[
                pl.BlockSpec((None, Tq, C), xmap),                  # x residual tile
                pl.BlockSpec((None, n_head, Tq, hd), qmap),         # Q tile (head-major, pre-scaled)
                pl.BlockSpec((None, n_head, T, hd), kvmap),         # K full-seq (resident per batch)
                pl.BlockSpec((None, n_head, T, hd), kvmap),         # V full-seq (resident per batch)
                _const_spec((C, C)),          # w_proj
                _const_spec((1, C)),          # b_proj
                _const_spec((1, C)),          # ln2 w
                _const_spec((1, C)),          # ln2 b
                _const_spec((C, 4 * C)),      # w_fc
                _const_spec((1, 4 * C)),      # b_fc
                _const_spec((4 * C, C)),      # w_proj2
                _const_spec((1, C)),          # b_proj2
            ],
            out_specs=pl.BlockSpec((None, Tq, C), xmap),
            scratch_shapes=[
                pltpu.VMEM((n_head, Tq, 1), jnp.float32),    # m (running max)
                pltpu.VMEM((n_head, Tq, 1), jnp.float32),    # l (running denom)
                pltpu.VMEM((n_head, Tq, hd), jnp.float32),   # acc
            ],
        ),
        compiler_params=pltpu.CompilerParams(
            dimension_semantics=("parallel", "parallel"),    # shards over both v7x TensorCores
            vmem_limit_bytes=_vmem_limit(est_b)),
    )(x, q, k, v, w_proj_bf, b_proj, ln2_w, ln2_b, w_fc_bf, b_fc, w_proj2_bf, b_proj2)
    return out


# ------------------------------------ pure-JAX reference ------------------------------------ #
def block_reference(x, params, n_head):
    (ln1_w, ln1_b, w_attn, b_attn, w_proj, b_proj,
     ln2_w, ln2_b, w_fc, b_fc, w_proj2, b_proj2) = params
    B, T, C = x.shape
    hd = C // n_head

    def ln(v, w, b):
        mu = jnp.mean(v, -1, keepdims=True)
        var = jnp.mean((v - mu) ** 2, -1, keepdims=True)
        return (v - mu) / jnp.sqrt(var + 1e-5) * w + b

    h = ln(x, ln1_w, ln1_b)
    qkv = h @ w_attn + b_attn
    q, k, v = jnp.split(qkv, 3, axis=-1)
    q = q.reshape(B, T, n_head, hd).transpose(0, 2, 1, 3)
    k = k.reshape(B, T, n_head, hd).transpose(0, 2, 1, 3)
    v = v.reshape(B, T, n_head, hd).transpose(0, 2, 1, 3)
    att = jnp.einsum("bhtd,bhsd->bhts", q, k) / math.sqrt(hd)
    mask = jnp.tril(jnp.ones((T, T), bool))
    att = jnp.where(mask, att, -jnp.inf)
    att = jax.nn.softmax(att, axis=-1)
    y = jnp.einsum("bhts,bhsd->bhtd", att, v)
    y = y.transpose(0, 2, 1, 3).reshape(B, T, C)
    x = x + (y @ w_proj + b_proj)
    h2 = ln(x, ln2_w, ln2_b)
    ff = h2 @ w_fc + b_fc
    ff = 0.5 * ff * (1.0 + jax.lax.erf(ff / math.sqrt(2.0)))
    x = x + (ff @ w_proj2 + b_proj2)
    return x


if __name__ == "__main__":
    # config: n_emb=32, n_head=4, bias=True, dropout=0.0; B=2, T=8
    B, T, C, n_head = 2, 8, 32, 4
    key = jax.random.PRNGKey(0)
    keys = jax.random.split(key, 8)

    std = 0.02
    x = jax.random.normal(keys[0], (B, T, C), jnp.float32)

    ln1_w = jnp.ones((1, C), jnp.float32)
    ln1_b = jnp.zeros((1, C), jnp.float32)
    w_attn = std * jax.random.normal(keys[1], (C, 3 * C), jnp.float32)
    b_attn = jnp.zeros((1, 3 * C), jnp.float32)
    w_proj = std * jax.random.normal(keys[2], (C, C), jnp.float32)
    b_proj = jnp.zeros((1, C), jnp.float32)
    ln2_w = jnp.ones((1, C), jnp.float32)
    ln2_b = jnp.zeros((1, C), jnp.float32)
    w_fc = std * jax.random.normal(keys[3], (C, 4 * C), jnp.float32)
    b_fc = jnp.zeros((1, 4 * C), jnp.float32)
    w_proj2 = std * jax.random.normal(keys[4], (4 * C, C), jnp.float32)
    b_proj2 = jnp.zeros((1, C), jnp.float32)

    params = (ln1_w, ln1_b, w_attn, b_attn, w_proj, b_proj,
              ln2_w, ln2_b, w_fc, b_fc, w_proj2, b_proj2)

    out = block_forward(x, params, n_head)
    out = jax.block_until_ready(out)

    ref = block_reference(x, params, n_head)
    # bf16 matmul operands -> slightly looser tolerance vs the f32 reference
    if not np.allclose(np.asarray(out), np.asarray(ref), atol=5e-2, rtol=5e-2):
        raise AssertionError("Pallas output does not match JAX reference")

    print("KERNEL_OK")
</pallas_src>

<mosaic_0001>
module attributes {stable_mosaic.version = 11 : i64} {
  func.func @ln_qkv_kernel(%arg0: i32, %arg1: i32, %arg2: memref<1x8x32xf32, #tpu.memory_space<vmem>>, %arg3: memref<1x32xf32, #tpu.memory_space<vmem>>, %arg4: memref<1x32xf32, #tpu.memory_space<vmem>>, %arg5: memref<32x96xbf16, #tpu.memory_space<vmem>>, %arg6: memref<1x96xf32, #tpu.memory_space<vmem>>, %arg7: memref<1x4x8x8xbf16, #tpu.memory_space<vmem>>, %arg8: memref<1x4x8x8xbf16, #tpu.memory_space<vmem>>, %arg9: memref<1x4x8x8xbf16, #tpu.memory_space<vmem>>) attributes {dimension_semantics = [#tpu.dimension_semantics<parallel>, #tpu.dimension_semantics<parallel>], iteration_bounds = array<i64: 2, 1>, scalar_prefetch = 0 : i64, scratch_operands = 0 : i64, tpu.core_type = #tpu.core_type<tc>, window_params = [{transform_indices = @transform_0, window_bounds = array<i64: 1, 8, 32>}, {pipeline_mode = #tpu.pipeline_mode<synchronous>, transform_indices = @transform_1, window_bounds = array<i64: 1, 32>}, {pipeline_mode = #tpu.pipeline_mode<synchronous>, transform_indices = @transform_2, window_bounds = array<i64: 1, 32>}, {pipeline_mode = #tpu.pipeline_mode<synchronous>, transform_indices = @transform_3, window_bounds = array<i64: 32, 96>}, {pipeline_mode = #tpu.pipeline_mode<synchronous>, transform_indices = @transform_4, window_bounds = array<i64: 1, 96>}, {transform_indices = @transform_5, window_bounds = array<i64: 1, 4, 8, 8>}, {transform_indices = @transform_6, window_bounds = array<i64: 1, 4, 8, 8>}, {transform_indices = @transform_7, window_bounds = array<i64: 1, 4, 8, 8>}]} {
    %c0 = arith.constant 0 : index
    %c0_0 = arith.constant 0 : index
    %c0_1 = arith.constant 0 : index
    %0 = vector.load %arg2[%c0, %c0_0, %c0_1] : memref<1x8x32xf32, #tpu.memory_space<vmem>>, vector<1x8x32xf32>
    %1 = vector.shape_cast %0 : vector<1x8x32xf32> to vector<8x32xf32>
    %c0_2 = arith.constant 0 : index
    %c0_3 = arith.constant 0 : index
    %2 = vector.load %arg3[%c0_2, %c0_3] : memref<1x32xf32, #tpu.memory_space<vmem>>, vector<1x32xf32>
    %c0_4 = arith.constant 0 : index
    %c0_5 = arith.constant 0 : index
    %3 = vector.load %arg4[%c0_4, %c0_5] : memref<1x32xf32, #tpu.memory_space<vmem>>, vector<1x32xf32>
    %cst = arith.constant dense<0.000000e+00> : vector<8xf32>
    %4 = vector.multi_reduction <add>, %1, %cst [1] : vector<8x32xf32> to vector<8xf32>
    %5 = vector.shape_cast %4 : vector<8xf32> to vector<8x1xf32>
    %cst_6 = arith.constant 3.200000e+01 : f32
    %6 = vector.broadcast %cst_6 : f32 to vector<8x1xf32>
    %7 = arith.divf %5, %6 : vector<8x1xf32>
    %8 = vector.broadcast %7 : vector<8x1xf32> to vector<8x32xf32>
    %9 = arith.subf %1, %8 : vector<8x32xf32>
    %10 = arith.mulf %9, %9 : vector<8x32xf32>
    %cst_7 = arith.constant dense<0.000000e+00> : vector<8xf32>
    %11 = vector.multi_reduction <add>, %10, %cst_7 [1] : vector<8x32xf32> to vector<8xf32>
    %12 = vector.shape_cast %11 : vector<8xf32> to vector<8x1xf32>
    %cst_8 = arith.constant 3.200000e+01 : f32
    %13 = vector.broadcast %cst_8 : f32 to vector<8x1xf32>
    %14 = arith.divf %12, %13 : vector<8x1xf32>
    %15 = vector.broadcast %7 : vector<8x1xf32> to vector<8x32xf32>
    %16 = arith.subf %1, %15 : vector<8x32xf32>
    %cst_9 = arith.constant 9.99999974E-6 : f32
    %17 = vector.broadcast %cst_9 : f32 to vector<8x1xf32>
    %18 = arith.addf %14, %17 : vector<8x1xf32>
    %19 = math.rsqrt %18 : vector<8x1xf32>
    %20 = vector.broadcast %19 : vector<8x1xf32> to vector<8x32xf32>
    %21 = arith.mulf %16, %20 : vector<8x32xf32>
    %22 = vector.broadcast %2 : vector<1x32xf32> to vector<8x32xf32>
    %23 = arith.mulf %21, %22 : vector<8x32xf32>
    %24 = vector.broadcast %3 : vector<1x32xf32> to vector<8x32xf32>
    %25 = arith.addf %23, %24 : vector<8x32xf32>
    %26 = arith.truncf %25 : vector<8x32xf32> to vector<8x32xbf16>
    %c0_10 = arith.constant 0 : index
    %c0_11 = arith.constant 0 : index
    %27 = vector.load %arg5[%c0_10, %c0_11] : memref<32x96xbf16, #tpu.memory_space<vmem>>, vector<32x96xbf16>
    %cst_12 = arith.constant dense<0.000000e+00> : vector<8x96xf32>
    %28 = tpu.matmul %26, %27, %cst_12 {dimension_numbers = #tpu.dot_dimension_numbers<[1], [0], [0], [1], [0, 0, 1, 1], [], []>} : vector<8x32xbf16>, vector<32x96xbf16>, vector<8x96xf32> -> vector<8x96xf32>
    %c0_13 = arith.constant 0 : index
    %c0_14 = arith.constant 0 : index
    %29 = vector.load %arg6[%c0_13, %c0_14] : memref<1x96xf32, #tpu.memory_space<vmem>>, vector<1x96xf32>
    %30 = vector.broadcast %29 : vector<1x96xf32> to vector<8x96xf32>
    %31 = arith.addf %28, %30 : vector<8x96xf32>
    %32 = vector.extract_strided_slice %31 {offsets = [0, 0], sizes = [8, 32], strides = [1, 1]} : vector<8x96xf32> to vector<8x32xf32>
    %cst_15 = arith.constant 0.353553385 : f32
    %33 = vector.broadcast %cst_15 : f32 to vector<8x32xf32>
    %34 = arith.mulf %32, %33 : vector<8x32xf32>
    %35 = vector.shape_cast %34 : vector<8x32xf32> to vector<8x4x8xf32>
    %36 = tpu.transpose %35, [1, 0, 2] : vector<8x4x8xf32> -> vector<4x8x8xf32>
    %37 = arith.truncf %36 : vector<4x8x8xf32> to vector<4x8x8xbf16>
    %c0_16 = arith.constant 0 : index
    %c0_17 = arith.constant 0 : index
    %c0_18 = arith.constant 0 : index
    %c0_19 = arith.constant 0 : index
    %38 = vector.load %arg7[%c0_16, %c0_17, %c0_18, %c0_19] : memref<1x4x8x8xbf16, #tpu.memory_space<vmem>>, vector<1x4x8x8xbf16>
    %39 = vector.shape_cast %38 : vector<1x4x8x8xbf16> to vector<4x8x8xbf16>
    %40 = vector.shape_cast %37 : vector<4x8x8xbf16> to vector<1x4x8x8xbf16>
    tpu.vector_store %arg7[%c0_16, %c0_17, %c0_18, %c0_19], %40 {strides = array<i32>} : memref<1x4x8x8xbf16, #tpu.memory_space<vmem>>, vector<1x4x8x8xbf16>,
    %41 = vector.extract_strided_slice %31 {offsets = [0, 32], sizes = [8, 32], strides = [1, 1]} : vector<8x96xf32> to vector<8x32xf32>
    %42 = vector.shape_cast %41 : vector<8x32xf32> to vector<8x4x8xf32>
    %43 = tpu.transpose %42, [1, 0, 2] : vector<8x4x8xf32> -> vector<4x8x8xf32>
    %44 = arith.truncf %43 : vector<4x8x8xf32> to vector<4x8x8xbf16>
    %c0_20 = arith.constant 0 : index
    %c0_21 = arith.constant 0 : index
    %c0_22 = arith.constant 0 : index
    %c0_23 = arith.constant 0 : index
    %45 = vector.load %arg8[%c0_20, %c0_21, %c0_22, %c0_23] : memref<1x4x8x8xbf16, #tpu.memory_space<vmem>>, vector<1x4x8x8xbf16>
    %46 = vector.shape_cast %45 : vector<1x4x8x8xbf16> to vector<4x8x8xbf16>
    %47 = vector.shape_cast %44 : vector<4x8x8xbf16> to vector<1x4x8x8xbf16>
    tpu.vector_store %arg8[%c0_20, %c0_21, %c0_22, %c0_23], %47 {strides = array<i32>} : memref<1x4x8x8xbf16, #tpu.memory_space<vmem>>, vector<1x4x8x8xbf16>,
    %48 = vector.extract_strided_slice %31 {offsets = [0, 64], sizes = [8, 32], strides = [1, 1]} : vector<8x96xf32> to vector<8x32xf32>
    %49 = vector.shape_cast %48 : vector<8x32xf32> to vector<8x4x8xf32>
    %50 = tpu.transpose %49, [1, 0, 2] : vector<8x4x8xf32> -> vector<4x8x8xf32>
    %51 = arith.truncf %50 : vector<4x8x8xf32> to vector<4x8x8xbf16>
    %c0_24 = arith.constant 0 : index
    %c0_25 = arith.constant 0 : index
    %c0_26 = arith.constant 0 : index
    %c0_27 = arith.constant 0 : index
    %52 = vector.load %arg9[%c0_24, %c0_25, %c0_26, %c0_27] : memref<1x4x8x8xbf16, #tpu.memory_space<vmem>>, vector<1x4x8x8xbf16>
    %53 = vector.shape_cast %52 : vector<1x4x8x8xbf16> to vector<4x8x8xbf16>
    %54 = vector.shape_cast %51 : vector<4x8x8xbf16> to vector<1x4x8x8xbf16>
    tpu.vector_store %arg9[%c0_24, %c0_25, %c0_26, %c0_27], %54 {strides = array<i32>} : memref<1x4x8x8xbf16, #tpu.memory_space<vmem>>, vector<1x4x8x8xbf16>,
    return
  }
  func.func @transform_0(%arg0: i32, %arg1: i32) -> (i32, i32, i32) {
    %c0_i32 = arith.constant 0 : i32
    %c0_i32_0 = arith.constant 0 : i32
    return %arg0, %arg1, %c0_i32 : i32, i32, i32
  }
  func.func @transform_1(%arg0: i32, %arg1: i32) -> (i32, i32) {
    %c0_i32 = arith.constant 0 : i32
    %c0_i32_0 = arith.constant 0 : i32
    %c0_i32_1 = arith.constant 0 : i32
    return %c0_i32, %c0_i32_0 : i32, i32
  }
  func.func @transform_2(%arg0: i32, %arg1: i32) -> (i32, i32) {
    %c0_i32 = arith.constant 0 : i32
    %c0_i32_0 = arith.constant 0 : i32
    %c0_i32_1 = arith.constant 0 : i32
    return %c0_i32, %c0_i32_0 : i32, i32
  }
  func.func @transform_3(%arg0: i32, %arg1: i32) -> (i32, i32) {
    %c0_i32 = arith.constant 0 : i32
    %c0_i32_0 = arith.constant 0 : i32
    %c0_i32_1 = arith.constant 0 : i32
    return %c0_i32, %c0_i32_0 : i32, i32
  }
  func.func @transform_4(%arg0: i32, %arg1: i32) -> (i32, i32) {
    %c0_i32 = arith.constant 0 : i32
    %c0_i32_0 = arith.constant 0 : i32
    %c0_i32_1 = arith.constant 0 : i32
    return %c0_i32, %c0_i32_0 : i32, i32
  }
  func.func @transform_5(%arg0: i32, %arg1: i32) -> (i32, i32, i32, i32) {
    %c0_i32 = arith.constant 0 : i32
    %c0_i32_0 = arith.constant 0 : i32
    %c0_i32_1 = arith.constant 0 : i32
    return %arg0, %c0_i32, %arg1, %c0_i32_0 : i32, i32, i32, i32
  }
  func.func @transform_6(%arg0: i32, %arg1: i32) -> (i32, i32, i32, i32) {
    %c0_i32 = arith.constant 0 : i32
    %c0_i32_0 = arith.constant 0 : i32
    %c0_i32_1 = arith.constant 0 : i32
    return %arg0, %c0_i32, %arg1, %c0_i32_0 : i32, i32, i32, i32
  }
  func.func @transform_7(%arg0: i32, %arg1: i32) -> (i32, i32, i32, i32) {
    %c0_i32 = arith.constant 0 : i32
    %c0_i32_0 = arith.constant 0 : i32
    %c0_i32_1 = arith.constant 0 : i32
    return %arg0, %c0_i32, %arg1, %c0_i32_0 : i32, i32, i32, i32
  }
}

</mosaic_0001>

<llo_original>
// kernel: tpu_custom_call.1
$region0: #{tpu_custom_call.1}
  #allocation0 [shape = 'u32[]', space=smem, size = 0x4, offset = 0x4, fixed_abs, tag = 'smem constant byte address 0x4 - core index']
  #allocation1 [shape = 'u32[144,128]{1,0:T(1,128)}', space=vmem, size = 0x12000, scoped, tag = 'internal scratch']
  %s0 = inlined_call_operand.hbm [shape: f32[2,8,32], index: 0, kind: input, shape index: {}]
  %s1 = inlined_call_operand.vmem [shape: f32[1,32], index: 1, kind: input, shape index: {}]
  %s2 = inlined_call_operand.vmem [shape: f32[1,32], index: 2, kind: input, shape index: {}]
  %s3 = inlined_call_operand.hbm [shape: bf16[32,96], index: 3, kind: input, shape index: {}]
  %s4 = inlined_call_operand.vmem [shape: f32[1,96], index: 4, kind: input, shape index: {}]
  %s5 = inlined_call_operand.hbm [shape: bf16[2,4,8,8], index: 5, kind: output, shape index: {0}]
  %s6 = inlined_call_operand.hbm [shape: bf16[2,4,8,8], index: 6, kind: output, shape index: {1}]
  %s7 = inlined_call_operand.hbm [shape: bf16[2,4,8,8], index: 7, kind: output, shape index: {2}]
  %8 = xla_tuple %s5, %s6, %s7
  %s9 = sld [smem:[#allocation0]]
  $region77: #{tpu_custom_call.1} parent=0
    _
  %s11 = ssub.s32 1, %s9
  %s12 = scalar_select 0, %s11, %s9
  $region1: #{tpu_custom_call.1} parent=0
    #allocation2 [shape = 'u8[8192]{0}', space=vmem, size = 0x2000, scoped, tag = 'input window, operand 0']
    #allocation3 [shape = 's32[2]{0}', space=sflag, size = 0x8, scoped, tag = 'scoped memory for tpu_custom_call.1']
    #allocation4 [shape = 's32[2]{0}', space=sflag, size = 0x8, scoped, tag = 'scoped memory for tpu_custom_call.1']
    #allocation5 [shape = 'u8[8192]{0}', space=vmem, size = 0x2000, scoped, tag = 'input window, operand 3, single buffered']
    #allocation6 [shape = 's32[1]{0}', space=sflag, size = 0x4, scoped, tag = 'scoped memory for tpu_custom_call.1']
    #allocation7 [shape = 'u8[16384]{0}', space=vmem, size = 0x4000, scoped, tag = 'output window, operand 0']
    #allocation8 [shape = 'u8[16384]{0}', space=vmem, size = 0x4000, scoped, tag = 'output window, operand 1']
    #allocation9 [shape = 's32[2]{0}', space=sflag, size = 0x8, scoped, tag = 'scoped memory for tpu_custom_call.1']
    #allocation10 [shape = 'u8[16384]{0}', space=vmem, size = 0x4000, scoped, tag = 'output window, operand 2']
    %13 = vsyncpa [#allocation3], 0
    %s14 = scalar_lea.sflag [#allocation3], 1
    %15 = vsyncpa %s14, 0
    %16 = vsyncpa [#allocation6], 0
    %17 = vsyncpa [#allocation4], 0
    %s18 = scalar_lea.sflag [#allocation4], 1
    %19 = vsyncpa %s18, 0
    %20 = vsyncpa [#allocation9], 0
    %s21 = scalar_lea.sflag [#allocation9], 1
    %22 = vsyncpa %s21, 0
    loop: start=0, step=1, limit=4
    $region2: #{tpu_custom_call.1} parent=1 // loop_pre_header
      _
    $region3: #{tpu_custom_call.1} parent=1 // loop_header
      %s24 = sphi 0, %s28
      %p25 = scmp.ge.s32.totalorder %s24, 4
      %s31 = sphi 0, %s43
      %s32 = sphi 0, %s39
      %s33 = sphi 0, %s31
      %s34 = sphi 0, %s32
      %s35 = sphi 0, %s33
      %s36 = sphi 0, %s34
      %s48 = sphi 0, %s50
      %s51 = sphi 0, %s48
      %s52 = sphi 0, %s51
      %s68 = sphi 0, %s52
      %s72 = sphi 0, %s72
      %s74 = sphi 0, %s72
      %s75 = sphi 0, %s74
      %s89 = sphi 0, %s75
      %s93 = sphi 0, %s93
      %s95 = sphi 0, %s93
      %s96 = sphi 0, %s95
      %s110 = sphi 0, %s96
      %s114 = sphi 0, %s114
      %s116 = sphi 0, %s114
      %s117 = sphi 0, %s116
      %s131 = sphi 0, %s117
      %s135 = sphi 0, %s135
      %s137 = sphi 0, %s135
      %s138 = sphi 0, %s137
      %s152 = sphi 0, %s138
      %s160 = sphi 0, %s162
      %s163 = sphi 0, %s160
      %s164 = sphi 0, %s163
      %s180 = sphi 0, %s164
      %s188 = sphi 0, %s190
      %s191 = sphi 0, %s188
      %s192 = sphi 0, %s191
      %s208 = sphi 0, %s192
      %s216 = sphi 0, %s218
      %s219 = sphi 0, %s216
      %s220 = sphi 0, %s219
      %s236 = sphi 0, %s220
    $region4: #{tpu_custom_call.1} parent=1 // loop_header_branch
      %27 = sbr.rel (%p25) target = $region8
    $region5: #{tpu_custom_call.1} parent=1 // loop_body
      %s29 = ssub.s32 %s24, 1
      %s30 = ssub.s32 %s24, 2
      %s37 = sadd.s32 1, %s32
      %p38 = scmp.ge.s32.totalorder %s37, 1
      %s39 = scalar_select %p38, 0, %s37
      %s40 = sadd.s32 1, %s31
      %s41 = scalar_select %p38, %s40, %s31
      %p42 = scmp.ge.s32.totalorder %s41, 2
      %s43 = scalar_select %p42, 0, %s41
      %s44 = ssub.s32 %s31, %s43
      %s45 = ssub.s32 %s32, %s39
      %s46 = sor.u32 %s44, %s45
      %p47 = scmp.eq.s32.totalorder %s46, 0
      %s49 = sadd.s32 %s48, 1
      %s50 = scalar_select %p47, %s48, %s49
      %p53 = pneg %p47
      %p54 = scmp.eq.s32.totalorder %s24, 1
      %p55 = por %p53, %p54
      %p56 = scmp.ne.s32.totalorder %s48, %s51
      %p57 = scmp.eq.s32.totalorder %s24, 0
      %p58 = por %p56, %p57
      %p59 = scmp.ne.s32.totalorder %s48, %s51
      %p60 = scmp.eq.s32.totalorder %s29, 1
      %p61 = por %p59, %p60
      %p62 = scmp.ne.s32.totalorder %s51, %s52
      %p63 = scmp.eq.s32.totalorder %s29, 0
      %p64 = por %p62, %p63
      %p65 = scmp.ne.s32.totalorder %s51, %s52
      %p66 = scmp.eq.s32.totalorder %s30, 1
      %p67 = por %p65, %p66
      %p69 = scmp.ne.s32.totalorder %s52, %s68
      %p70 = scmp.eq.s32.totalorder %s30, 0
      %p71 = por %p69, %p70
      %s73 = sadd.s32 %s72, 1
      %p76 = scmp.eq.s32.totalorder %s24, 1
      %p77 = scmp.ne.s32.totalorder %s72, %s74
      %p78 = scmp.eq.s32.totalorder %s24, 0
      %p79 = por %p77, %p78
      %p80 = scmp.ne.s32.totalorder %s72, %s74
      %p81 = scmp.eq.s32.totalorder %s29, 1
      %p82 = por %p80, %p81
      %p83 = scmp.ne.s32.totalorder %s74, %s75
      %p84 = scmp.eq.s32.totalorder %s29, 0
      %p85 = por %p83, %p84
      %p86 = scmp.ne.s32.totalorder %s74, %s75
      %p87 = scmp.eq.s32.totalorder %s30, 1
      %p88 = por %p86, %p87
      %p90 = scmp.ne.s32.totalorder %s75, %s89
      %p91 = scmp.eq.s32.totalorder %s30, 0
      %p92 = por %p90, %p91
      %s94 = sadd.s32 %s93, 1
      %p97 = scmp.eq.s32.totalorder %s24, 1
      %p98 = scmp.ne.s32.totalorder %s93, %s95
      %p99 = scmp.eq.s32.totalorder %s24, 0
      %p100 = por %p98, %p99
      %p101 = scmp.ne.s32.totalorder %s93, %s95
      %p102 = scmp.eq.s32.totalorder %s29, 1
      %p103 = por %p101, %p102
      %p104 = scmp.ne.s32.totalorder %s95, %s96
      %p105 = scmp.eq.s32.totalorder %s29, 0
      %p106 = por %p104, %p105
      %p107 = scmp.ne.s32.totalorder %s95, %s96
      %p108 = scmp.eq.s32.totalorder %s30, 1
      %p109 = por %p107, %p108
      %p111 = scmp.ne.s32.totalorder %s96, %s110
      %p112 = scmp.eq.s32.totalorder %s30, 0
      %p113 = por %p111, %p112
      %s115 = sadd.s32 %s114, 1
      %p118 = scmp.eq.s32.totalorder %s24, 1
      %p119 = scmp.ne.s32.totalorder %s114, %s116
      %p120 = scmp.eq.s32.totalorder %s24, 0
      %p121 = por %p119, %p120
      %p122 = scmp.ne.s32.totalorder %s114, %s116
      %p123 = scmp.eq.s32.totalorder %s29, 1
      %p124 = por %p122, %p123
      %p125 = scmp.ne.s32.totalorder %s116, %s117
      %p126 = scmp.eq.s32.totalorder %s29, 0
      %p127 = por %p125, %p126
      %p128 = scmp.ne.s32.totalorder %s116, %s117
      %p129 = scmp.eq.s32.totalorder %s30, 1
      %p130 = por %p128, %p129
      %p132 = scmp.ne.s32.totalorder %s117, %s131
      %p133 = scmp.eq.s32.totalorder %s30, 0
      %p134 = por %p132, %p133
      %s136 = sadd.s32 %s135, 1
      %p139 = scmp.eq.s32.totalorder %s24, 1
      %p140 = scmp.ne.s32.totalorder %s135, %s137
      %p141 = scmp.eq.s32.totalorder %s24, 0
      %p142 = por %p140, %p141
      %p143 = scmp.ne.s32.totalorder %s135, %s137
      %p144 = scmp.eq.s32.totalorder %s29, 1
      %p145 = por %p143, %p144
      %p146 = scmp.ne.s32.totalorder %s137, %s138
      %p147 = scmp.eq.s32.totalorder %s29, 0
      %p148 = por %p146, %p147
      %p149 = scmp.ne.s32.totalorder %s137, %s138
      %p150 = scmp.eq.s32.totalorder %s30, 1
      %p151 = por %p149, %p150
      %p153 = scmp.ne.s32.totalorder %s138, %s152
      %p154 = scmp.eq.s32.totalorder %s30, 0
      %p155 = por %p153, %p154
      %s156 = ssub.s32 %s31, %s43
      %s157 = ssub.s32 %s32, %s39
      %s158 = sor.u32 %s156, %s157
      %p159 = scmp.eq.s32.totalorder %s158, 0
      %s161 = sadd.s32 %s160, 1
      %s162 = scalar_select %p159, %s160, %s161
      %p165 = pneg %p159
      %p166 = scmp.eq.s32.totalorder %s24, 1
      %p167 = por %p165, %p166
      %p168 = scmp.ne.s32.totalorder %s160, %s163
      %p169 = scmp.eq.s32.totalorder %s24, 0
      %p170 = por %p168, %p169
      %p171 = scmp.ne.s32.totalorder %s160, %s163
      %p172 = scmp.eq.s32.totalorder %s29, 1
      %p173 = por %p171, %p172
      %p174 = scmp.ne.s32.totalorder %s163, %s164
      %p175 = scmp.eq.s32.totalorder %s29, 0
      %p176 = por %p174, %p175
      %p177 = scmp.ne.s32.totalorder %s163, %s164
      %p178 = scmp.eq.s32.totalorder %s30, 1
      %p179 = por %p177, %p178
      %p181 = scmp.ne.s32.totalorder %s164, %s180
      %p182 = scmp.eq.s32.totalorder %s30, 0
      %p183 = por %p181, %p182
      %s184 = ssub.s32 %s31, %s43
      %s185 = ssub.s32 %s32, %s39
      %s186 = sor.u32 %s184, %s185
      %p187 = scmp.eq.s32.totalorder %s186, 0
      %s189 = sadd.s32 %s188, 1
      %s190 = scalar_select %p187, %s188, %s189
      %p193 = pneg %p187
      %p194 = scmp.eq.s32.totalorder %s24, 1
      %p195 = por %p193, %p194
      %p196 = scmp.ne.s32.totalorder %s188, %s191
      %p197 = scmp.eq.s32.totalorder %s24, 0
      %p198 = por %p196, %p197
      %p199 = scmp.ne.s32.totalorder %s188, %s191
      %p200 = scmp.eq.s32.totalorder %s29, 1
      %p201 = por %p199, %p200
      %p202 = scmp.ne.s32.totalorder %s191, %s192
      %p203 = scmp.eq.s32.totalorder %s29, 0
      %p204 = por %p202, %p203
      %p205 = scmp.ne.s32.totalorder %s191, %s192
      %p206 = scmp.eq.s32.totalorder %s30, 1
      %p207 = por %p205, %p206
      %p209 = scmp.ne.s32.totalorder %s192, %s208
      %p210 = scmp.eq.s32.totalorder %s30, 0
      %p211 = por %p209, %p210
      %s212 = ssub.s32 %s31, %s43
      %s213 = ssub.s32 %s32, %s39
      %s214 = sor.u32 %s212, %s213
      %p215 = scmp.eq.s32.totalorder %s214, 0
      %s217 = sadd.s32 %s216, 1
      %s218 = scalar_select %p215, %s216, %s217
      %p221 = pneg %p215
      %p222 = scmp.eq.s32.totalorder %s24, 1
      %p223 = por %p221, %p222
      %p224 = scmp.ne.s32.totalorder %s216, %s219
      %p225 = scmp.eq.s32.totalorder %s24, 0
      %p226 = por %p224, %p225
      %p227 = scmp.ne.s32.totalorder %s216, %s219
      %p228 = scmp.eq.s32.totalorder %s29, 1
      %p229 = por %p227, %p228
      %p230 = scmp.ne.s32.totalorder %s219, %s220
      %p231 = scmp.eq.s32.totalorder %s29, 0
      %p232 = por %p230, %p231
      %p233 = scmp.ne.s32.totalorder %s219, %s220
      %p234 = scmp.eq.s32.totalorder %s30, 1
      %p235 = por %p233, %p234
      %p237 = scmp.ne.s32.totalorder %s220, %s236
      %p238 = scmp.eq.s32.totalorder %s30, 0
      %p239 = por %p237, %p238
      %p240 = scmp.le.s32.totalorder 1, %s24
      %p241 = scmp.lt.s32.totalorder %s24, 3
      %p242 = pnand %p240, %p241
      %p243 = pneg %p242
      // Predicated region
      $region9: #{tpu_custom_call.1} parent=5 // pred_check
        _
      $region10: #{tpu_custom_call.1} parent=5 // pred_check_branch
        %245 = sbr.rel (%p242) target = $region12
      $region11: #{tpu_custom_call.1} parent=5 // pred_region
        %s246 = ssub.s32 %s24, 1
        // Predicated region
        $region13: #{tpu_custom_call.1} parent=11 // pred_check
          %p247 = pneg %p85
        $region14: #{tpu_custom_call.1} parent=11 // pred_check_branch
          %249 = sbr.rel (%p247) target = $region16
        $region15: #{tpu_custom_call.1} parent=11 // pred_region
          _
        $region16: #{tpu_custom_call.1} parent=11 // pred_fallthru
          _
        // Predicated region
        $region17: #{tpu_custom_call.1} parent=11 // pred_check
          %p250 = pneg %p106
        $region18: #{tpu_custom_call.1} parent=11 // pred_check_branch
          %252 = sbr.rel (%p250) target = $region20
        $region19: #{tpu_custom_call.1} parent=11 // pred_region
          _
        $region20: #{tpu_custom_call.1} parent=11 // pred_fallthru
          _
        // Predicated region
        $region21: #{tpu_custom_call.1} parent=11 // pred_check
          %p253 = pneg %p127
        $region22: #{tpu_custom_call.1} parent=11 // pred_check_branch
          %255 = sbr.rel (%p253) target = $region24
        $region23: #{tpu_custom_call.1} parent=11 // pred_region
          %s257 = ssub.s32 256, 256
          %258 = vsyncadd [#allocation6], %s257
          %s259 = sshll.u32 [#allocation5], 4
          %s260 = int_to_ptr.vmem [resolvable:$true] %s259
          %265 = dma.hbm_to_vmem [thread:$0]  %s3, 256, %s260, [#allocation6], 64, 64, 4
        $region24: #{tpu_custom_call.1} parent=11 // pred_fallthru
          _
        // Predicated region
        $region25: #{tpu_custom_call.1} parent=11 // pred_check
          %p266 = pneg %p148
        $region26: #{tpu_custom_call.1} parent=11 // pred_check_branch
          %268 = sbr.rel (%p266) target = $region28
        $region27: #{tpu_custom_call.1} parent=11 // pred_region
          _
        $region28: #{tpu_custom_call.1} parent=11 // pred_fallthru
          _
      $region12: #{tpu_custom_call.1} parent=5 // pred_fallthru
        _
      %p269 = scmp.lt.s32.totalorder %s24, 2
      // Predicated region
      $region29: #{tpu_custom_call.1} parent=5 // pred_check
        %p270 = pneg %p269
      $region30: #{tpu_custom_call.1} parent=5 // pred_check_branch
        %272 = sbr.rel (%p270) target = $region32
      $region31: #{tpu_custom_call.1} parent=5 // pred_region
        // Predicated region
        $region33: #{tpu_custom_call.1} parent=31 // pred_check
          %p273 = pneg %p58
        $region34: #{tpu_custom_call.1} parent=31 // pred_check_branch
          %275 = sbr.rel (%p273) target = $region36
        $region35: #{tpu_custom_call.1} parent=31 // pred_region
          %s276 = sand.u32 %s48, 1
          %s277 = scalar_lea.sflag [#allocation3], %s276
          %s278 = sand.u32 %s48, 1
          %s279 = smul.addr %s278, 8
          %s280 = scalar_lea.vmem [#allocation2], %s279
          %s282 = ssub.s32 128, 128
          %283 = vsyncadd %s277, %s282
          %s284 = sadd.s32 %s32, %s31
          %s285 = smul.addr %s284, 128
          %s286 = scalar_lea.hbm %s0, %s285
          %s288 = sshll.u32 %s280, 4
          %s289 = int_to_ptr.vmem [resolvable:$true] %s288
          %291 = dma.hbm_to_vmem [thread:$0]  %s286, 128, %s289, %s277
        $region36: #{tpu_custom_call.1} parent=31 // pred_fallthru
          _
      $region32: #{tpu_custom_call.1} parent=5 // pred_fallthru
        _
      %p292 = scmp.le.s32.totalorder 1, %s24
      %p293 = scmp.lt.s32.totalorder %s24, 3
      %p294 = pnand %p292, %p293
      %p295 = pneg %p294
      // Predicated region
      $region37: #{tpu_custom_call.1} parent=5 // pred_check
        _
      $region38: #{tpu_custom_call.1} parent=5 // pred_check_branch
        %297 = sbr.rel (%p294) target = $region40
      $region39: #{tpu_custom_call.1} parent=5 // pred_region
        %s298 = ssub.s32 %s24, 1
        %s299 = sand.u32 %s51, 1
        %s300 = scalar_lea.sflag [#allocation3], %s299
        %s301 = sand.u32 %s51, 1
        %s302 = smul.addr %s301, 8
        %s303 = scalar_lea.vmem [#allocation2], %s302
        // Predicated region
        $region41: #{tpu_custom_call.1} parent=39 // pred_check
          %p304 = pneg %p64
        $region42: #{tpu_custom_call.1} parent=39 // pred_check_branch
          %306 = sbr.rel (%p304) target = $region44
        $region43: #{tpu_custom_call.1} parent=39 // pred_region
          %307 = dma.done %s300, 128
        $region44: #{tpu_custom_call.1} parent=39 // pred_fallthru
          _
        // Predicated region
        $region45: #{tpu_custom_call.1} parent=39 // pred_check
          %p308 = pneg %p127
        $region46: #{tpu_custom_call.1} parent=39 // pred_check_branch
          %310 = sbr.rel (%p308) target = $region48
        $region47: #{tpu_custom_call.1} parent=39 // pred_region
          %311 = dma.done [#allocation6], 256
        $region48: #{tpu_custom_call.1} parent=39 // pred_fallthru
          _
        %s312 = sand.u32 %s51, 1
        %s313 = scalar_lea.sflag [#allocation3], %s312
        %s314 = sand.u32 %s51, 1
        %s315 = smul.addr %s314, 8
        %s316 = scalar_lea.vmem [#allocation2], %s315
        %p317 = pneg %p64
        %p318 = pneg %p61
        %p319 = pneg %p85
        %p320 = pneg %p82
        %p321 = pneg %p106
        %p322 = pneg %p103
        %p323 = pneg %p127
        %p324 = pneg %p124
        %p325 = pneg %p148
        %p326 = pneg %p145
        %p327 = pneg %p176
        %p328 = pneg %p173
        %s329 = sand.u32 %s163, 1
        %s330 = scalar_lea.sflag [#allocation4], %s329
        %s331 = sand.u32 %s163, 1
        %s332 = smul.addr %s331, 16
        %s333 = scalar_lea.vmem [#allocation7], %s332
        %p334 = pneg %p204
        %p335 = pneg %p201
        %s336 = sand.u32 %s29, 1
        %s337 = scalar_lea.sflag [#allocation9], %s336
        %s338 = sand.u32 %s191, 1
        %s339 = smul.addr %s338, 16
        %s340 = scalar_lea.vmem [#allocation8], %s339
        %p341 = pneg %p232
        %p342 = pneg %p229
        %s343 = sand.u32 %s29, 1
        %s344 = scalar_lea.sflag [#allocation9], %s343
        %s345 = sand.u32 %s219, 1
        %s346 = smul.addr %s345, 16
        %s347 = scalar_lea.vmem [#allocation10], %s346
        %v349 = vld [vmem:[%s303] sm:$0xff]
        %v350 = vld [vmem:[%s1] sm:$0x1]
        %v351 = vld [vmem:[%s2] sm:$0x1]
        %vm352 = vcmask 261120
        %v353 = vsel %vm352, %v349, 0.0
        %354 = vadd.xlane.f32.xlu0 %v353
        %v355 = vpop.xlane.xlu0 %354
        %v356 = vrcp.pop 32.0
        %v357 = vmul.f32 %v355, %v356
        %v358 = vsub.f32 %v349, %v357
        %v359 = vmul.f32 %v358, %v358
        %v360 = vsel %vm352, %v359, 0.0
        %361 = vadd.xlane.f32.xlu0 %v360
        %v362 = vpop.xlane.xlu0 %361
        %v363 = vmul.f32 %v362, %v356
        %v364 = vadd.f32 %v363, 1e-05
        %v365 = vrsqrt.pop %v364
        %v366 = vmul.f32 %v358, %v365
        %v368 = vlaneseq
        %v369 = vshrl.u32 %v368, 7
        %v370 = vsub.s32 0, %v369
        %v371 = vrot.slane %v350, %v370
        %v373 = vmul.f32 %v366, %v371
        %v375 = vlaneseq
        %v376 = vshrl.u32 %v375, 7
        %v377 = vsub.s32 0, %v376
        %v378 = vrot.slane %v351, %v377
        %v380 = vadd.f32 %v373, %v378
        %v381 = vpack.c.bf16 %v380, %v380
        %v382 = vld [vmem:[#allocation5] sm:$0xf]
        %v383 = vld [vmem:[#allocation5 + $0x4] sm:$0xf]
        %v384 = vld [vmem:[#allocation5 + $0x8] sm:$0xf]
        %v385 = vld [vmem:[#allocation5 + $0xc] sm:$0xf]
        %v386 = vld [vmem:[%s4] sm:$0x1]
        %v388 = vlaneseq
        %v389 = vshrl.u32 %v388, 7
        %v390 = vsub.s32 0, %v389
        %v391 = vrot.slane %v386, %v390
        %v397 = vunpack.c.l.b16 %v382
        %v398 = vunpack.c.l.b16 %v383
        %v399 = vunpack.c.l.b16 %v384
        %v400 = vunpack.c.l.b16 %v385
        %v401 = vpack.c.b16 %v398, %v397
        %v402 = vpack.c.b16 %v400, %v399
        %v406 = vsel %vm352, %v381, 0
        %408 = vmatprep.subr.bf16.mxu0 0
        %409 = vmatpush1.bf16.msra.mxu0 0
        %410 = vmatprep.subr.bf16.mxu0 0
        %411 = vmatpush1.bf16.msra.mxu0 0
        %412 = vmatprep.subr.bf16.mxu0 0
        %413 = vmatpush1.bf16.msra.mxu0 0
        %414 = vmatprep.subr.bf16.mxu0 0
        %415 = vmatpush1.bf16.msra.mxu0 0
        %416 = vmatprep.subr.bf16.mxu0 0
        %417 = vmatpush1.bf16.msra.mxu0 0
        %418 = vmatprep.subr.bf16.mxu0 0
        %419 = vmatpush1.bf16.msra.mxu0 0
        %420 = vmatprep.subr.bf16.mxu0 0
        %421 = vmatpush1.bf16.msra.mxu0 %v402
        %422 = vmatprep.subr.bf16.mxu0 0
        %423 = vmatpush1.bf16.msra.mxu0 %v401
        %424 = vmatprep.subr.bf16.mxu0 0
        %425 = vmatpush2.bf16.msra.mxu0 0
        %426 = vmatprep.subr.bf16.mxu0 0
        %427 = vmatpush2.bf16.msra.mxu0 0
        %428 = vmatprep.subr.bf16.mxu0 0
        %429 = vmatpush2.bf16.msra.mxu0 0
        %430 = vmatprep.subr.bf16.mxu0 0
        %431 = vmatpush2.bf16.msra.mxu0 0
        %432 = vmatprep.subr.bf16.mxu0 0
        %433 = vmatpush2.bf16.msra.mxu0 0
        %434 = vmatprep.subr.bf16.mxu0 0
        %435 = vmatpush2.bf16.msra.mxu0 0
        %436 = vmatprep.subr.bf16.mxu0 0
        %437 = vmatpush2.bf16.msra.mxu0 0
        %438 = vmatprep.subr.bf16.mxu0 0
        %439 = vmatpush2.bf16.msra.mxu0 0
        %440 = vmatprep.mubr.bf16.mxu0 0
        %441 = vmatmul.mubr.bf16.gmra.mxu0 %v406
        %v442 = vpop.f32.mrf.mxu0
        %v443 = vadd.f32 %v391, %v442
        %v444 = vpop.f32.mrf.mxu0
        %v445 = vpop.f32.mrf.mxu0
        %v446 = vpop.f32.mrf.mxu0
        %447 = vdwg.mxu0
        %v448 = vmul.f32 %v443, 0.35355338
        %450 = vrot.lane.b32.xlu0 %v448, 120
        %v451 = vpop.permute.xlu0 %450
        %453 = vrot.lane.b32.xlu0 %v448, 112
        %v454 = vpop.permute.xlu0 %453
        %456 = vrot.lane.b32.xlu0 %v448, 104
        %v457 = vpop.permute.xlu0 %456
        %v459 = vcombine.low %v448, %v454
        %v460 = vcombine.high %v448, %v454
        %v462 = vunpack.c.l.s4 1983009808
        %v463 = vunpack.c.0.s8 %v462
        %v464 = vlaneseq
        %v465 = vshrl.u32 %v464, 7
        %v466 = vsub.s32 %v463, %v465
        %v467 = vrot.slane %v459, %v466
        %v469 = vunpack.c.l.s4 1983009808
        %v470 = vunpack.c.0.s8 %v469
        %v471 = vlaneseq
        %v472 = vshrl.u32 %v471, 7
        %v473 = vsub.s32 %v470, %v472
        %v474 = vrot.slane %v460, %v473
        %v475 = vcombine.low %v451, %v457
        %v476 = vcombine.high %v451, %v457
        %v478 = vunpack.c.l.s4 1983009808
        %v479 = vunpack.c.0.s8 %v478
        %v480 = vlaneseq
        %v481 = vshrl.u32 %v480, 7
        %v482 = vsub.s32 %v479, %v481
        %v483 = vrot.slane %v475, %v482
        %v485 = vunpack.c.l.s4 1983009808
        %v486 = vunpack.c.0.s8 %v485
        %v487 = vlaneseq
        %v488 = vshrl.u32 %v487, 7
        %v489 = vsub.s32 %v486, %v488
        %v490 = vrot.slane %v476, %v489
        %v491 = vcombine.low %v467, %v483
        %v492 = vcombine.high %v467, %v483
        %v494 = vunpack.c.l.s4 1934713408
        %v495 = vunpack.c.0.s8 %v494
        %v496 = vlaneseq
        %v497 = vshrl.u32 %v496, 7
        %v498 = vsub.s32 %v495, %v497
        %v499 = vrot.slane %v491, %v498
        %v501 = vunpack.c.l.s4 1934713408
        %v502 = vunpack.c.0.s8 %v501
        %v503 = vlaneseq
        %v504 = vshrl.u32 %v503, 7
        %v505 = vsub.s32 %v502, %v504
        %v506 = vrot.slane %v492, %v505
        %v507 = vcombine.low %v474, %v490
        %v508 = vcombine.high %v474, %v490
        %v510 = vunpack.c.l.s4 1934713408
        %v511 = vunpack.c.0.s8 %v510
        %v512 = vlaneseq
        %v513 = vshrl.u32 %v512, 7
        %v514 = vsub.s32 %v511, %v513
        %v515 = vrot.slane %v507, %v514
        %v517 = vunpack.c.l.s4 1934713408
        %v518 = vunpack.c.0.s8 %v517
        %v519 = vlaneseq
        %v520 = vshrl.u32 %v519, 7
        %v521 = vsub.s32 %v518, %v520
        %v522 = vrot.slane %v508, %v521
        %v523 = vcombine.high %v499, 0.0
        %v524 = vcombine.high %v506, 0.0
        %v525 = vcombine.high %v515, 0.0
        %v526 = vcombine.high %v522, 0.0
        %v527 = vcombine.low %v499, %v506
        %v529 = vunpack.c.l.s4 1983009808
        %v530 = vunpack.c.0.s8 %v529
        %v531 = vlaneseq
        %v532 = vshrl.u32 %v531, 7
        %v533 = vsub.s32 %v530, %v532
        %v534 = vrot.slane %v527, %v533
        %v535 = vcombine.low %v523, %v524
        %v537 = vunpack.c.l.s4 1983009808
        %v538 = vunpack.c.0.s8 %v537
        %v539 = vlaneseq
        %v540 = vshrl.u32 %v539, 7
        %v541 = vsub.s32 %v538, %v540
        %v542 = vrot.slane %v535, %v541
        %v543 = vcombine.low %v515, %v522
        %v545 = vunpack.c.l.s4 1983009808
        %v546 = vunpack.c.0.s8 %v545
        %v547 = vlaneseq
        %v548 = vshrl.u32 %v547, 7
        %v549 = vsub.s32 %v546, %v548
        %v550 = vrot.slane %v543, %v549
        %v551 = vcombine.low %v525, %v526
        %v553 = vunpack.c.l.s4 1983009808
        %v554 = vunpack.c.0.s8 %v553
        %v555 = vlaneseq
        %v556 = vshrl.u32 %v555, 7
        %v557 = vsub.s32 %v554, %v556
        %v558 = vrot.slane %v551, %v557
        %v559 = vcombine.low %v534, %v542
        %v560 = vcombine.high %v534, %v542
        %v562 = vunpack.c.l.s4 1934713408
        %v563 = vunpack.c.0.s8 %v562
        %v564 = vlaneseq
        %v565 = vshrl.u32 %v564, 7
        %v566 = vsub.s32 %v563, %v565
        %v567 = vrot.slane %v559, %v566
        %v569 = vunpack.c.l.s4 1934713408
        %v570 = vunpack.c.0.s8 %v569
        %v571 = vlaneseq
        %v572 = vshrl.u32 %v571, 7
        %v573 = vsub.s32 %v570, %v572
        %v574 = vrot.slane %v560, %v573
        %v575 = vcombine.low %v550, %v558
        %v576 = vcombine.high %v550, %v558
        %v578 = vunpack.c.l.s4 1934713408
        %v579 = vunpack.c.0.s8 %v578
        %v580 = vlaneseq
        %v581 = vshrl.u32 %v580, 7
        %v582 = vsub.s32 %v579, %v581
        %v583 = vrot.slane %v575, %v582
        %v585 = vunpack.c.l.s4 1934713408
        %v586 = vunpack.c.0.s8 %v585
        %v587 = vlaneseq
        %v588 = vshrl.u32 %v587, 7
        %v589 = vsub.s32 %v586, %v588
        %v590 = vrot.slane %v576, %v589
        %v591 = vcombine.low %v567, %v583
        %v592 = vcombine.high %v567, %v583
        %v593 = vcombine.low %v574, %v590
        %v594 = vcombine.high %v574, %v590
        %v595 = vpack.c.bf16 %v591, %v591
        %v596 = vpack.c.bf16 %v592, %v592
        %v597 = vpack.c.bf16 %v593, %v593
        %v598 = vpack.c.bf16 %v594, %v594
        %vm599 = vcmask 60416
        %600 = vst.msk [vmem:[%s333] sm:$0xf] %vm599, %v595
        %601 = vst.msk [vmem:[%s333 + $0x4] sm:$0xf] %vm599, %v596
        %602 = vst.msk [vmem:[%s333 + $0x8] sm:$0xf] %vm599, %v597
        %603 = vst.msk [vmem:[%s333 + $0xc] sm:$0xf] %vm599, %v598
        %605 = vrot.lane.b32.xlu0 %v443, 120
        %v606 = vpop.permute.xlu0 %605
        %607 = vrot.lane.b32.xlu0 %v443, 112
        %v608 = vpop.permute.xlu0 %607
        %609 = vrot.lane.b32.xlu0 %v443, 104
        %v610 = vpop.permute.xlu0 %609
        %611 = vrot.lane.b32.xlu0 %v443, 96
        %v612 = vpop.permute.xlu0 %611
        %613 = vrot.lane.b32.xlu0 %v606, 96
        %v614 = vpop.permute.xlu0 %613
        %615 = vrot.lane.b32.xlu0 %v608, 96
        %v616 = vpop.permute.xlu0 %615
        %617 = vrot.lane.b32.xlu0 %v610, 96
        %v618 = vpop.permute.xlu0 %617
        %v623 = vcombine.low %v612, %v616
        %v624 = vcombine.high %v612, %v616
        %v626 = vunpack.c.l.s4 1983009808
        %v627 = vunpack.c.0.s8 %v626
        %v628 = vlaneseq
        %v629 = vshrl.u32 %v628, 7
        %v630 = vsub.s32 %v627, %v629
        %v631 = vrot.slane %v623, %v630
        %v633 = vunpack.c.l.s4 1983009808
        %v634 = vunpack.c.0.s8 %v633
        %v635 = vlaneseq
        %v636 = vshrl.u32 %v635, 7
        %v637 = vsub.s32 %v634, %v636
        %v638 = vrot.slane %v624, %v637
        %v639 = vcombine.low %v614, %v618
        %v640 = vcombine.high %v614, %v618
        %v642 = vunpack.c.l.s4 1983009808
        %v643 = vunpack.c.0.s8 %v642
        %v644 = vlaneseq
        %v645 = vshrl.u32 %v644, 7
        %v646 = vsub.s32 %v643, %v645
        %v647 = vrot.slane %v639, %v646
        %v649 = vunpack.c.l.s4 1983009808
        %v650 = vunpack.c.0.s8 %v649
        %v651 = vlaneseq
        %v652 = vshrl.u32 %v651, 7
        %v653 = vsub.s32 %v650, %v652
        %v654 = vrot.slane %v640, %v653
        %v655 = vcombine.low %v631, %v647
        %v656 = vcombine.high %v631, %v647
        %v658 = vunpack.c.l.s4 1934713408
        %v659 = vunpack.c.0.s8 %v658
        %v660 = vlaneseq
        %v661 = vshrl.u32 %v660, 7
        %v662 = vsub.s32 %v659, %v661
        %v663 = vrot.slane %v655, %v662
        %v665 = vunpack.c.l.s4 1934713408
        %v666 = vunpack.c.0.s8 %v665
        %v667 = vlaneseq
        %v668 = vshrl.u32 %v667, 7
        %v669 = vsub.s32 %v666, %v668
        %v670 = vrot.slane %v656, %v669
        %v671 = vcombine.low %v638, %v654
        %v672 = vcombine.high %v638, %v654
        %v674 = vunpack.c.l.s4 1934713408
        %v675 = vunpack.c.0.s8 %v674
        %v676 = vlaneseq
        %v677 = vshrl.u32 %v676, 7
        %v678 = vsub.s32 %v675, %v677
        %v679 = vrot.slane %v671, %v678
        %v681 = vunpack.c.l.s4 1934713408
        %v682 = vunpack.c.0.s8 %v681
        %v683 = vlaneseq
        %v684 = vshrl.u32 %v683, 7
        %v685 = vsub.s32 %v682, %v684
        %v686 = vrot.slane %v672, %v685
        %v687 = vcombine.high %v663, 0.0
        %v688 = vcombine.high %v670, 0.0
        %v689 = vcombine.high %v679, 0.0
        %v690 = vcombine.high %v686, 0.0
        %v691 = vcombine.low %v663, %v670
        %v693 = vunpack.c.l.s4 1983009808
        %v694 = vunpack.c.0.s8 %v693
        %v695 = vlaneseq
        %v696 = vshrl.u32 %v695, 7
        %v697 = vsub.s32 %v694, %v696
        %v698 = vrot.slane %v691, %v697
        %v699 = vcombine.low %v687, %v688
        %v701 = vunpack.c.l.s4 1983009808
        %v702 = vunpack.c.0.s8 %v701
        %v703 = vlaneseq
        %v704 = vshrl.u32 %v703, 7
        %v705 = vsub.s32 %v702, %v704
        %v706 = vrot.slane %v699, %v705
        %v707 = vcombine.low %v679, %v686
        %v709 = vunpack.c.l.s4 1983009808
        %v710 = vunpack.c.0.s8 %v709
        %v711 = vlaneseq
        %v712 = vshrl.u32 %v711, 7
        %v713 = vsub.s32 %v710, %v712
        %v714 = vrot.slane %v707, %v713
        %v715 = vcombine.low %v689, %v690
        %v717 = vunpack.c.l.s4 1983009808
        %v718 = vunpack.c.0.s8 %v717
        %v719 = vlaneseq
        %v720 = vshrl.u32 %v719, 7
        %v721 = vsub.s32 %v718, %v720
        %v722 = vrot.slane %v715, %v721
        %v723 = vcombine.low %v698, %v706
        %v724 = vcombine.high %v698, %v706
        %v726 = vunpack.c.l.s4 1934713408
        %v727 = vunpack.c.0.s8 %v726
        %v728 = vlaneseq
        %v729 = vshrl.u32 %v728, 7
        %v730 = vsub.s32 %v727, %v729
        %v731 = vrot.slane %v723, %v730
        %v733 = vunpack.c.l.s4 1934713408
        %v734 = vunpack.c.0.s8 %v733
        %v735 = vlaneseq
        %v736 = vshrl.u32 %v735, 7
        %v737 = vsub.s32 %v734, %v736
        %v738 = vrot.slane %v724, %v737
        %v739 = vcombine.low %v714, %v722
        %v740 = vcombine.high %v714, %v722
        %v742 = vunpack.c.l.s4 1934713408
        %v743 = vunpack.c.0.s8 %v742
        %v744 = vlaneseq
        %v745 = vshrl.u32 %v744, 7
        %v746 = vsub.s32 %v743, %v745
        %v747 = vrot.slane %v739, %v746
        %v749 = vunpack.c.l.s4 1934713408
        %v750 = vunpack.c.0.s8 %v749
        %v751 = vlaneseq
        %v752 = vshrl.u32 %v751, 7
        %v753 = vsub.s32 %v750, %v752
        %v754 = vrot.slane %v740, %v753
        %v755 = vcombine.low %v731, %v747
        %v756 = vcombine.high %v731, %v747
        %v757 = vcombine.low %v738, %v754
        %v758 = vcombine.high %v738, %v754
        %v759 = vpack.c.bf16 %v755, %v755
        %v760 = vpack.c.bf16 %v756, %v756
        %v761 = vpack.c.bf16 %v757, %v757
        %v762 = vpack.c.bf16 %v758, %v758
        %763 = vst.msk [vmem:[%s340] sm:$0xf] %vm599, %v759
        %764 = vst.msk [vmem:[%s340 + $0x4] sm:$0xf] %vm599, %v760
        %765 = vst.msk [vmem:[%s340 + $0x8] sm:$0xf] %vm599, %v761
        %766 = vst.msk [vmem:[%s340 + $0xc] sm:$0xf] %vm599, %v762
        %767 = vrot.lane.b32.xlu0 %v443, 64
        %v768 = vpop.permute.xlu0 %767
        %769 = vrot.lane.b32.xlu0 %v606, 64
        %v770 = vpop.permute.xlu0 %769
        %771 = vrot.lane.b32.xlu0 %v608, 64
        %v772 = vpop.permute.xlu0 %771
        %773 = vrot.lane.b32.xlu0 %v610, 64
        %v774 = vpop.permute.xlu0 %773
        %v779 = vcombine.low %v768, %v772
        %v780 = vcombine.high %v768, %v772
        %v782 = vunpack.c.l.s4 1983009808
        %v783 = vunpack.c.0.s8 %v782
        %v784 = vlaneseq
        %v785 = vshrl.u32 %v784, 7
        %v786 = vsub.s32 %v783, %v785
        %v787 = vrot.slane %v779, %v786
        %v789 = vunpack.c.l.s4 1983009808
        %v790 = vunpack.c.0.s8 %v789
        %v791 = vlaneseq
        %v792 = vshrl.u32 %v791, 7
        %v793 = vsub.s32 %v790, %v792
        %v794 = vrot.slane %v780, %v793
        %v795 = vcombine.low %v770, %v774
        %v796 = vcombine.high %v770, %v774
        %v798 = vunpack.c.l.s4 1983009808
        %v799 = vunpack.c.0.s8 %v798
        %v800 = vlaneseq
        %v801 = vshrl.u32 %v800, 7
        %v802 = vsub.s32 %v799, %v801
        %v803 = vrot.slane %v795, %v802
        %v805 = vunpack.c.l.s4 1983009808
        %v806 = vunpack.c.0.s8 %v805
        %v807 = vlaneseq
        %v808 = vshrl.u32 %v807, 7
        %v809 = vsub.s32 %v806, %v808
        %v810 = vrot.slane %v796, %v809
        %v811 = vcombine.low %v787, %v803
        %v812 = vcombine.high %v787, %v803
        %v814 = vunpack.c.l.s4 1934713408
        %v815 = vunpack.c.0.s8 %v814
        %v816 = vlaneseq
        %v817 = vshrl.u32 %v816, 7
        %v818 = vsub.s32 %v815, %v817
        %v819 = vrot.slane %v811, %v818
        %v821 = vunpack.c.l.s4 1934713408
        %v822 = vunpack.c.0.s8 %v821
        %v823 = vlaneseq
        %v824 = vshrl.u32 %v823, 7
        %v825 = vsub.s32 %v822, %v824
        %v826 = vrot.slane %v812, %v825
        %v827 = vcombine.low %v794, %v810
        %v828 = vcombine.high %v794, %v810
        %v830 = vunpack.c.l.s4 1934713408
        %v831 = vunpack.c.0.s8 %v830
        %v832 = vlaneseq
        %v833 = vshrl.u32 %v832, 7
        %v834 = vsub.s32 %v831, %v833
        %v835 = vrot.slane %v827, %v834
        %v837 = vunpack.c.l.s4 1934713408
        %v838 = vunpack.c.0.s8 %v837
        %v839 = vlaneseq
        %v840 = vshrl.u32 %v839, 7
        %v841 = vsub.s32 %v838, %v840
        %v842 = vrot.slane %v828, %v841
        %v843 = vcombine.high %v819, 0.0
        %v844 = vcombine.high %v826, 0.0
        %v845 = vcombine.high %v835, 0.0
        %v846 = vcombine.high %v842, 0.0
        %v847 = vcombine.low %v819, %v826
        %v849 = vunpack.c.l.s4 1983009808
        %v850 = vunpack.c.0.s8 %v849
        %v851 = vlaneseq
        %v852 = vshrl.u32 %v851, 7
        %v853 = vsub.s32 %v850, %v852
        %v854 = vrot.slane %v847, %v853
        %v855 = vcombine.low %v843, %v844
        %v857 = vunpack.c.l.s4 1983009808
        %v858 = vunpack.c.0.s8 %v857
        %v859 = vlaneseq
        %v860 = vshrl.u32 %v859, 7
        %v861 = vsub.s32 %v858, %v860
        %v862 = vrot.slane %v855, %v861
        %v863 = vcombine.low %v835, %v842
        %v865 = vunpack.c.l.s4 1983009808
        %v866 = vunpack.c.0.s8 %v865
        %v867 = vlaneseq
        %v868 = vshrl.u32 %v867, 7
        %v869 = vsub.s32 %v866, %v868
        %v870 = vrot.slane %v863, %v869
        %v871 = vcombine.low %v845, %v846
        %v873 = vunpack.c.l.s4 1983009808
        %v874 = vunpack.c.0.s8 %v873
        %v875 = vlaneseq
        %v876 = vshrl.u32 %v875, 7
        %v877 = vsub.s32 %v874, %v876
        %v878 = vrot.slane %v871, %v877
        %v879 = vcombine.low %v854, %v862
        %v880 = vcombine.high %v854, %v862
        %v882 = vunpack.c.l.s4 1934713408
        %v883 = vunpack.c.0.s8 %v882
        %v884 = vlaneseq
        %v885 = vshrl.u32 %v884, 7
        %v886 = vsub.s32 %v883, %v885
        %v887 = vrot.slane %v879, %v886
        %v889 = vunpack.c.l.s4 1934713408
        %v890 = vunpack.c.0.s8 %v889
        %v891 = vlaneseq
        %v892 = vshrl.u32 %v891, 7
        %v893 = vsub.s32 %v890, %v892
        %v894 = vrot.slane %v880, %v893
        %v895 = vcombine.low %v870, %v878
        %v896 = vcombine.high %v870, %v878
        %v898 = vunpack.c.l.s4 1934713408
        %v899 = vunpack.c.0.s8 %v898
        %v900 = vlaneseq
        %v901 = vshrl.u32 %v900, 7
        %v902 = vsub.s32 %v899, %v901
        %v903 = vrot.slane %v895, %v902
        %v905 = vunpack.c.l.s4 1934713408
        %v906 = vunpack.c.0.s8 %v905
        %v907 = vlaneseq
        %v908 = vshrl.u32 %v907, 7
        %v909 = vsub.s32 %v906, %v908
        %v910 = vrot.slane %v896, %v909
        %v911 = vcombine.low %v887, %v903
        %v912 = vcombine.high %v887, %v903
        %v913 = vcombine.low %v894, %v910
        %v914 = vcombine.high %v894, %v910
        %v915 = vpack.c.bf16 %v911, %v911
        %v916 = vpack.c.bf16 %v912, %v912
        %v917 = vpack.c.bf16 %v913, %v913
        %v918 = vpack.c.bf16 %v914, %v914
        %919 = vst.msk [vmem:[%s347] sm:$0xf] %vm599, %v915
        %920 = vst.msk [vmem:[%s347 + $0x4] sm:$0xf] %vm599, %v916
        %921 = vst.msk [vmem:[%s347 + $0x8] sm:$0xf] %vm599, %v917
        %922 = vst.msk [vmem:[%s347 + $0xc] sm:$0xf] %vm599, %v918
        %s923 = sand.u32 %s163, 1
        %s924 = scalar_lea.sflag [#allocation4], %s923
        %s925 = sand.u32 %s163, 1
        %s926 = smul.addr %s925, 16
        %s927 = scalar_lea.vmem [#allocation7], %s926
        %s928 = sand.u32 %s29, 1
        %s929 = scalar_lea.sflag [#allocation9], %s928
        %s930 = sand.u32 %s191, 1
        %s931 = smul.addr %s930, 16
        %s932 = scalar_lea.vmem [#allocation8], %s931
        %s933 = sand.u32 %s29, 1
        %s934 = scalar_lea.sflag [#allocation9], %s933
        %s935 = sand.u32 %s219, 1
        %s936 = smul.addr %s935, 16
        %s937 = scalar_lea.vmem [#allocation10], %s936
        // Predicated region
        $region49: #{tpu_custom_call.1} parent=39 // pred_check
          %p938 = pneg %p173
        $region50: #{tpu_custom_call.1} parent=39 // pred_check_branch
          %940 = sbr.rel (%p938) target = $region52
        $region51: #{tpu_custom_call.1} parent=39 // pred_region
          %s942 = ssub.s32 256, 256
          %943 = vsyncadd %s924, %s942
          %s944 = smul.addr %s33, 4
          %s945 = sadd.s32 %s34, %s944
          %s946 = smul.addr %s945, 64
          %s947 = scalar_lea.hbm %s5, %s946
          %s948 = sshll.u32 %s927, 4
          %s949 = int_to_ptr.vmem [resolvable:$true] %s948
          %954 = dma.vmem_to_hbm [thread:$0]  %s949, 256, %s947, %s924, 64, 64, 4
        $region52: #{tpu_custom_call.1} parent=39 // pred_fallthru
          _
        // Predicated region
        $region53: #{tpu_custom_call.1} parent=39 // pred_check
          %p955 = pneg %p201
        $region54: #{tpu_custom_call.1} parent=39 // pred_check_branch
          %957 = sbr.rel (%p955) target = $region56
        $region55: #{tpu_custom_call.1} parent=39 // pred_region
          %s959 = ssub.s32 256, 256
          %960 = vsyncadd %s929, %s959
          %s961 = smul.addr %s33, 4
          %s962 = sadd.s32 %s34, %s961
          %s963 = smul.addr %s962, 64
          %s964 = scalar_lea.hbm %s6, %s963
          %s965 = sshll.u32 %s932, 4
          %s966 = int_to_ptr.vmem [resolvable:$true] %s965
          %971 = dma.vmem_to_hbm [thread:$0]  %s966, 256, %s964, %s929, 64, 64, 4
        $region56: #{tpu_custom_call.1} parent=39 // pred_fallthru
          _
        // Predicated region
        $region57: #{tpu_custom_call.1} parent=39 // pred_check
          %p972 = pneg %p229
        $region58: #{tpu_custom_call.1} parent=39 // pred_check_branch
          %974 = sbr.rel (%p972) target = $region60
        $region59: #{tpu_custom_call.1} parent=39 // pred_region
          %s976 = ssub.s32 256, 256
          %977 = vsyncadd %s934, %s976
          %s978 = smul.addr %s33, 4
          %s979 = sadd.s32 %s34, %s978
          %s980 = smul.addr %s979, 64
          %s981 = scalar_lea.hbm %s7, %s980
          %s982 = sshll.u32 %s937, 4
          %s983 = int_to_ptr.vmem [resolvable:$true] %s982
          %988 = dma.vmem_to_hbm [thread:$0]  %s983, 256, %s981, %s934, 64, 64, 4
        $region60: #{tpu_custom_call.1} parent=39 // pred_fallthru
          _
      $region40: #{tpu_custom_call.1} parent=5 // pred_fallthru
        _
      %p989 = scmp.le.s32.totalorder 2, %s24
      // Predicated region
      $region61: #{tpu_custom_call.1} parent=5 // pred_check
        %p990 = pneg %p989
      $region62: #{tpu_custom_call.1} parent=5 // pred_check_branch
        %992 = sbr.rel (%p990) target = $region64
      $region63: #{tpu_custom_call.1} parent=5 // pred_region
        %s993 = ssub.s32 %s24, 2
        // Predicated region
        $region65: #{tpu_custom_call.1} parent=63 // pred_check
          %p994 = pneg %p179
        $region66: #{tpu_custom_call.1} parent=63 // pred_check_branch
          %996 = sbr.rel (%p994) target = $region68
        $region67: #{tpu_custom_call.1} parent=63 // pred_region
          %s997 = sand.u32 %s164, 1
          %s998 = scalar_lea.sflag [#allocation4], %s997
          %s999 = sand.u32 %s164, 1
          %s1000 = smul.addr %s999, 16
          %s1001 = scalar_lea.vmem [#allocation7], %s1000
          %1002 = dma.done %s998, 256
        $region68: #{tpu_custom_call.1} parent=63 // pred_fallthru
          _
        // Predicated region
        $region69: #{tpu_custom_call.1} parent=63 // pred_check
          %p1003 = pneg %p207
        $region70: #{tpu_custom_call.1} parent=63 // pred_check_branch
          %1005 = sbr.rel (%p1003) target = $region72
        $region71: #{tpu_custom_call.1} parent=63 // pred_region
          %s1006 = sand.u32 %s30, 1
          %s1007 = scalar_lea.sflag [#allocation9], %s1006
          %s1008 = sand.u32 %s192, 1
          %s1009 = smul.addr %s1008, 16
          %s1010 = scalar_lea.vmem [#allocation8], %s1009
          %1011 = dma.done %s1007, 256
        $region72: #{tpu_custom_call.1} parent=63 // pred_fallthru
          _
        // Predicated region
        $region73: #{tpu_custom_call.1} parent=63 // pred_check
          %p1012 = pneg %p235
        $region74: #{tpu_custom_call.1} parent=63 // pred_check_branch
          %1014 = sbr.rel (%p1012) target = $region76
        $region75: #{tpu_custom_call.1} parent=63 // pred_region
          %s1015 = sand.u32 %s30, 1
          %s1016 = scalar_lea.sflag [#allocation9], %s1015
          %s1017 = sand.u32 %s220, 1
          %s1018 = smul.addr %s1017, 16
          %s1019 = scalar_lea.vmem [#allocation10], %s1018
          %1020 = dma.done %s1016, 256
        $region76: #{tpu_custom_call.1} parent=63 // pred_fallthru
          _
      $region64: #{tpu_custom_call.1} parent=5 // pred_fallthru
        _
    $region6: #{tpu_custom_call.1} parent=1 // loop_footer
      %s28 = sadd.s32 1, %s24
    $region7: #{tpu_custom_call.1} parent=1 // loop_footer_branch
      %23 = sbr.rel target = $region3
    $region8: #{tpu_custom_call.1} parent=1 // loop_exit
      _
    %1021 = vsyncpa [#allocation3], 1
    %s1022 = scalar_lea.sflag [#allocation3], 1
    %1023 = vsyncpa %s1022, 1
    %1024 = vsyncpa [#allocation6], 1
    %1025 = vsyncpa [#allocation4], 1
    %s1026 = scalar_lea.sflag [#allocation4], 1
    %1027 = vsyncpa %s1026, 1
    %1028 = vsyncpa [#allocation9], 1
    %s1029 = scalar_lea.sflag [#allocation9], 1
    %1030 = vsyncpa %s1029, 1

</llo_original>
